<compile_context>
chip_gen: v5e
topology: v5e:2x2
jax: 0.10.0
libtpu: 0.0.40
codegen_flags: <defaults>
</compile_context>

<pallas_src>
import functools

import jax
import jax.numpy as jnp
from jax.experimental import pallas as pl
from jax.experimental.pallas import tpu as pltpu


def _round_up(x, m):
    return ((x + m - 1) // m) * m


def _pad2(x, shape):
    """Zero-pad a 2-D array up to `shape`."""
    return jnp.pad(x, ((0, shape[0] - x.shape[0]), (0, shape[1] - x.shape[1])))


def _st_block_kernel(z_ref, w1_ref, b1_ref, w2_ref, b2_ref, w3_ref, b3_ref, o_ref):
    out_dim = o_ref.shape[-1]
    # Cast z to bf16 in-kernel (MXU-native on v6e/v7x); accumulate in f32.
    z = z_ref[...].astype(w1_ref.dtype)
    # Layer 1: Linear + LeakyReLU(0.2) (bias add / activation in f32 -> v5e-safe VPU)
    h1 = jnp.dot(z, w1_ref[...], preferred_element_type=jnp.float32) + b1_ref[...]
    h1 = jnp.where(h1 > 0, h1, 0.2 * h1)
    # Layer 2
    h2 = jnp.dot(h1.astype(w2_ref.dtype), w2_ref[...],
                 preferred_element_type=jnp.float32) + b2_ref[...]
    h2 = jnp.where(h2 > 0, h2, 0.2 * h2)
    # Layer 3 (no activation). Matmul runs on the 128-lane-padded weight; only the
    # logical out_dim columns are stored (masked store, unpadded HBM writeback).
    out = jnp.dot(h2.astype(w3_ref.dtype), w3_ref[...],
                  preferred_element_type=jnp.float32) + b3_ref[...]
    o_ref[...] = out[:, :out_dim].astype(o_ref.dtype)


@functools.partial(jax.jit, static_argnames=("block_rows",))
def st_block_forward(z, w1, b1, w2, b2, w3, b3, *, block_rows=4096):
    """Fused forward pass. z: (B, dz) f32; weights in PyTorch-Linear layout (in, out)."""
    B, dz = z.shape
    H = w1.shape[1]
    out_dim = w3.shape[1]

    compute_dtype = jnp.bfloat16      # matmul operand dtype; accumulation stays f32
    HP = _round_up(H, 128)            # lane-pad hidden dim (keep at 128 -- see header)
    OP = _round_up(out_dim, 128)      # padded matmul width; NOT the HBM output width

    # Pad weights/biases once (zero columns/rows -> identical math); matmul operands
    # in bf16, biases in f32 for the VPU bias-add.
    w1p = _pad2(w1, (dz, HP)).astype(compute_dtype)
    b1p = _pad2(b1, (1, HP)).astype(jnp.float32)
    w2p = _pad2(w2, (HP, HP)).astype(compute_dtype)
    b2p = _pad2(b2, (1, HP)).astype(jnp.float32)
    w3p = _pad2(w3, (HP, OP)).astype(compute_dtype)
    b3p = _pad2(b3, (1, OP)).astype(jnp.float32)

    # Batch tiling: large tiles to amortize per-step overhead, but keep >= 2 tiles
    # whenever possible so the "parallel" grid axis can shard across 2 TCs (v7x).
    B_r8 = _round_up(B, 8)
    desired = max(8, _round_up(block_rows, 8))
    num_tiles = max(2, pl.cdiv(B_r8, desired)) if B_r8 > 8 else 1
    TB = _round_up(pl.cdiv(B_r8, num_tiles), 8)
    B_pad = _round_up(B_r8, TB)
    grid = (B_pad // TB,)

    zp = z if B_pad == B else jnp.pad(z, ((0, B_pad - B), (0, 0)))  # stays f32

    cost = pl.CostEstimate(
        flops=2 * B_pad * (dz * HP + HP * HP + HP * OP),
        transcendentals=0,
        bytes_accessed=(B_pad * dz * 4                  # z in, f32
                        + B_pad * out_dim * 4           # out, unpadded f32
                        + (dz * HP + HP * HP + HP * OP) * 2   # bf16 weights
                        + (HP + HP + OP) * 4),          # f32 biases
    )

    out = pl.pallas_call(
        _st_block_kernel,
        out_shape=jax.ShapeDtypeStruct((B_pad, out_dim), jnp.float32),
        grid=grid,
        in_specs=[
            pl.BlockSpec((TB, dz), lambda i: (i, 0)),   # z: streamed per batch tile
            pl.BlockSpec((dz, HP), lambda i: (0, 0)),   # weights/biases: VMEM-resident
            pl.BlockSpec((1, HP), lambda i: (0, 0)),
            pl.BlockSpec((HP, HP), lambda i: (0, 0)),
            pl.BlockSpec((1, HP), lambda i: (0, 0)),
            pl.BlockSpec((HP, OP), lambda i: (0, 0)),
            pl.BlockSpec((1, OP), lambda i: (0, 0)),
        ],
        # Unpadded output: last dim equals the full array dim -> legal; the writeback
        # DMA is one contiguous copy per batch tile.
        out_specs=pl.BlockSpec((TB, out_dim), lambda i: (i, 0)),
        compiler_params=pltpu.CompilerParams(
            dimension_semantics=("parallel",),          # shard batch tiles across TCs (v7x)
            vmem_limit_bytes=32 * 1024 * 1024,          # safe on all of v5e/v6e/v7x
        ),
        cost_estimate=cost,
    )(zp, w1p, b1p, w2p, b2p, w3p, b3p)

    return out[:B, :]


def init_params(key, dz=10, hidden_dim=64, dtype=jnp.float32, zero_last=True):
    """nn.Linear-style init; zero_last=True mimics src_utils.Linear(..., zero=True)."""
    k1, k2, k3, k4, k5, k6 = jax.random.split(key, 6)

    def linear_init(kw, kb, fan_in, fan_out):
        bound = 1.0 / jnp.sqrt(fan_in)
        w = jax.random.uniform(kw, (fan_in, fan_out), dtype, -bound, bound)
        b = jax.random.uniform(kb, (1, fan_out), dtype, -bound, bound)
        return w, b

    w1, b1 = linear_init(k1, k2, dz, hidden_dim)
    w2, b2 = linear_init(k3, k4, hidden_dim, hidden_dim)
    if zero_last:
        w3 = jnp.zeros((hidden_dim, 2 * dz), dtype)
        b3 = jnp.zeros((1, 2 * dz), dtype)
    else:
        w3, b3 = linear_init(k5, k6, hidden_dim, 2 * dz)
    return w1, b1, w2, b2, w3, b3


def reference_forward(z, w1, b1, w2, b2, w3, b3, compute_dtype=jnp.float32):
    """Pure-JAX reference. compute_dtype=bf16 matches the kernel's matmul precision."""
    cd = compute_dtype

    def lrelu(x):
        return jnp.where(x > 0, x, 0.2 * x)

    h = lrelu(jnp.dot(z.astype(cd), w1.astype(cd),
                      preferred_element_type=jnp.float32) + b1)
    h = lrelu(jnp.dot(h.astype(cd), w2.astype(cd),
                      preferred_element_type=jnp.float32) + b2)
    return jnp.dot(h.astype(cd), w3.astype(cd),
                   preferred_element_type=jnp.float32) + b3


if __name__ == "__main__":
    dz, hidden_dim, batch = 10, 64, 64
    key = jax.random.PRNGKey(0)
    kz, kp = jax.random.split(key)

    z = jax.random.normal(kz, (batch, dz), jnp.float32)

    # ---- Test 1: module-default init (zero-initialized final layer), default tiling ----
    params0 = init_params(kp, dz=dz, hidden_dim=hidden_dim, zero_last=True)
    out0 = jax.block_until_ready(st_block_forward(z, *params0))
    assert out0.shape == (batch, 2 * dz), out0.shape
    ref0 = reference_forward(z, *params0)
    assert jnp.allclose(out0, ref0, atol=2e-2, rtol=2e-2), "mismatch (zero-init last layer)"

    # ---- Test 2: nonzero final layer + small tile so multiple grid steps are exercised ----
    params1 = init_params(kp, dz=dz, hidden_dim=hidden_dim, zero_last=False)
    out1 = jax.block_until_ready(st_block_forward(z, *params1, block_rows=16))
    # Matched precision (bf16 matmul inputs, f32 accumulate): tight tolerance.
    ref1_bf16 = reference_forward(z, *params1, compute_dtype=jnp.bfloat16)
    assert jnp.allclose(out1, ref1_bf16, atol=1e-3, rtol=1e-3), "mismatch vs bf16 reference"
    # Full-f32 reference: loose tolerance covers bf16 input rounding.
    ref1_f32 = reference_forward(z, *params1)
    assert jnp.allclose(out1, ref1_f32, atol=3e-2, rtol=3e-2), "mismatch vs f32 reference"

    print("KERNEL_OK")
</pallas_src>

<mosaic_0001>
module attributes {stable_mosaic.version = 11 : i64} {
  func.func @_st_block_kernel(%arg0: i32, %arg1: memref<32x10xf32, #tpu.memory_space<vmem>>, %arg2: memref<10x128xbf16, #tpu.memory_space<vmem>>, %arg3: memref<1x128xf32, #tpu.memory_space<vmem>>, %arg4: memref<128x128xbf16, #tpu.memory_space<vmem>>, %arg5: memref<1x128xf32, #tpu.memory_space<vmem>>, %arg6: memref<128x128xbf16, #tpu.memory_space<vmem>>, %arg7: memref<1x128xf32, #tpu.memory_space<vmem>>, %arg8: memref<32x20xf32, #tpu.memory_space<vmem>>) attributes {dimension_semantics = [#tpu.dimension_semantics<parallel>], iteration_bounds = array<i64: 2>, scalar_prefetch = 0 : i64, scratch_operands = 0 : i64, tpu.core_type = #tpu.core_type<tc>, window_params = [{transform_indices = @transform_0, window_bounds = array<i64: 32, 10>}, {pipeline_mode = #tpu.pipeline_mode<synchronous>, transform_indices = @transform_1, window_bounds = array<i64: 10, 128>}, {pipeline_mode = #tpu.pipeline_mode<synchronous>, transform_indices = @transform_2, window_bounds = array<i64: 1, 128>}, {pipeline_mode = #tpu.pipeline_mode<synchronous>, transform_indices = @transform_3, window_bounds = array<i64: 128, 128>}, {pipeline_mode = #tpu.pipeline_mode<synchronous>, transform_indices = @transform_4, window_bounds = array<i64: 1, 128>}, {pipeline_mode = #tpu.pipeline_mode<synchronous>, transform_indices = @transform_5, window_bounds = array<i64: 128, 128>}, {pipeline_mode = #tpu.pipeline_mode<synchronous>, transform_indices = @transform_6, window_bounds = array<i64: 1, 128>}, {transform_indices = @transform_7, window_bounds = array<i64: 32, 20>}]} {
    %c0 = arith.constant 0 : index
    %c0_0 = arith.constant 0 : index
    %0 = vector.load %arg1[%c0, %c0_0] : memref<32x10xf32, #tpu.memory_space<vmem>>, vector<32x10xf32>
    %1 = arith.truncf %0 : vector<32x10xf32> to vector<32x10xbf16>
    %c0_1 = arith.constant 0 : index
    %c0_2 = arith.constant 0 : index
    %2 = vector.load %arg2[%c0_1, %c0_2] : memref<10x128xbf16, #tpu.memory_space<vmem>>, vector<10x128xbf16>
    %cst = arith.constant dense<0.000000e+00> : vector<32x128xf32>
    %3 = tpu.matmul %1, %2, %cst {dimension_numbers = #tpu.dot_dimension_numbers<[1], [0], [0], [1], [0, 0, 1, 1], [], []>} : vector<32x10xbf16>, vector<10x128xbf16>, vector<32x128xf32> -> vector<32x128xf32>
    %c0_3 = arith.constant 0 : index
    %c0_4 = arith.constant 0 : index
    %4 = vector.load %arg3[%c0_3, %c0_4] : memref<1x128xf32, #tpu.memory_space<vmem>>, vector<1x128xf32>
    %5 = vector.broadcast %4 : vector<1x128xf32> to vector<32x128xf32>
    %6 = arith.addf %3, %5 : vector<32x128xf32>
    %cst_5 = arith.constant 0.000000e+00 : f32
    %7 = vector.broadcast %cst_5 : f32 to vector<32x128xf32>
    %8 = arith.cmpf ogt, %6, %7 : vector<32x128xf32>
    %cst_6 = arith.constant 2.000000e-01 : f32
    %9 = vector.broadcast %cst_6 : f32 to vector<32x128xf32>
    %10 = arith.mulf %9, %6 : vector<32x128xf32>
    %11 = arith.select %8, %6, %10 : vector<32x128xi1>, vector<32x128xf32>
    %12 = arith.truncf %11 : vector<32x128xf32> to vector<32x128xbf16>
    %c0_7 = arith.constant 0 : index
    %c0_8 = arith.constant 0 : index
    %13 = vector.load %arg4[%c0_7, %c0_8] : memref<128x128xbf16, #tpu.memory_space<vmem>>, vector<128x128xbf16>
    %cst_9 = arith.constant dense<0.000000e+00> : vector<32x128xf32>
    %14 = tpu.matmul %12, %13, %cst_9 {dimension_numbers = #tpu.dot_dimension_numbers<[1], [0], [0], [1], [0, 0, 1, 1], [], []>} : vector<32x128xbf16>, vector<128x128xbf16>, vector<32x128xf32> -> vector<32x128xf32>
    %c0_10 = arith.constant 0 : index
    %c0_11 = arith.constant 0 : index
    %15 = vector.load %arg5[%c0_10, %c0_11] : memref<1x128xf32, #tpu.memory_space<vmem>>, vector<1x128xf32>
    %16 = vector.broadcast %15 : vector<1x128xf32> to vector<32x128xf32>
    %17 = arith.addf %14, %16 : vector<32x128xf32>
    %cst_12 = arith.constant 0.000000e+00 : f32
    %18 = vector.broadcast %cst_12 : f32 to vector<32x128xf32>
    %19 = arith.cmpf ogt, %17, %18 : vector<32x128xf32>
    %cst_13 = arith.constant 2.000000e-01 : f32
    %20 = vector.broadcast %cst_13 : f32 to vector<32x128xf32>
    %21 = arith.mulf %20, %17 : vector<32x128xf32>
    %22 = arith.select %19, %17, %21 : vector<32x128xi1>, vector<32x128xf32>
    %23 = arith.truncf %22 : vector<32x128xf32> to vector<32x128xbf16>
    %c0_14 = arith.constant 0 : index
    %c0_15 = arith.constant 0 : index
    %24 = vector.load %arg6[%c0_14, %c0_15] : memref<128x128xbf16, #tpu.memory_space<vmem>>, vector<128x128xbf16>
    %cst_16 = arith.constant dense<0.000000e+00> : vector<32x128xf32>
    %25 = tpu.matmul %23, %24, %cst_16 {dimension_numbers = #tpu.dot_dimension_numbers<[1], [0], [0], [1], [0, 0, 1, 1], [], []>} : vector<32x128xbf16>, vector<128x128xbf16>, vector<32x128xf32> -> vector<32x128xf32>
    %c0_17 = arith.constant 0 : index
    %c0_18 = arith.constant 0 : index
    %26 = vector.load %arg7[%c0_17, %c0_18] : memref<1x128xf32, #tpu.memory_space<vmem>>, vector<1x128xf32>
    %27 = vector.broadcast %26 : vector<1x128xf32> to vector<32x128xf32>
    %28 = arith.addf %25, %27 : vector<32x128xf32>
    %29 = vector.extract_strided_slice %28 {offsets = [0, 0], sizes = [32, 20], strides = [1, 1]} : vector<32x128xf32> to vector<32x20xf32>
    %c0_19 = arith.constant 0 : index
    %c0_20 = arith.constant 0 : index
    %30 = vector.load %arg8[%c0_19, %c0_20] : memref<32x20xf32, #tpu.memory_space<vmem>>, vector<32x20xf32>
    tpu.vector_store %arg8[%c0_19, %c0_20], %29 {strides = array<i32>} : memref<32x20xf32, #tpu.memory_space<vmem>>, vector<32x20xf32>,
    return
  }
  func.func @transform_0(%arg0: i32) -> (i32, i32) {
    %c0_i32 = arith.constant 0 : i32
    %c0_i32_0 = arith.constant 0 : i32
    return %arg0, %c0_i32 : i32, i32
  }
  func.func @transform_1(%arg0: i32) -> (i32, i32) {
    %c0_i32 = arith.constant 0 : i32
    %c0_i32_0 = arith.constant 0 : i32
    %c0_i32_1 = arith.constant 0 : i32
    return %c0_i32, %c0_i32_0 : i32, i32
  }
  func.func @transform_2(%arg0: i32) -> (i32, i32) {
    %c0_i32 = arith.constant 0 : i32
    %c0_i32_0 = arith.constant 0 : i32
    %c0_i32_1 = arith.constant 0 : i32
    return %c0_i32, %c0_i32_0 : i32, i32
  }
  func.func @transform_3(%arg0: i32) -> (i32, i32) {
    %c0_i32 = arith.constant 0 : i32
    %c0_i32_0 = arith.constant 0 : i32
    %c0_i32_1 = arith.constant 0 : i32
    return %c0_i32, %c0_i32_0 : i32, i32
  }
  func.func @transform_4(%arg0: i32) -> (i32, i32) {
    %c0_i32 = arith.constant 0 : i32
    %c0_i32_0 = arith.constant 0 : i32
    %c0_i32_1 = arith.constant 0 : i32
    return %c0_i32, %c0_i32_0 : i32, i32
  }
  func.func @transform_5(%arg0: i32) -> (i32, i32) {
    %c0_i32 = arith.constant 0 : i32
    %c0_i32_0 = arith.constant 0 : i32
    %c0_i32_1 = arith.constant 0 : i32
    return %c0_i32, %c0_i32_0 : i32, i32
  }
  func.func @transform_6(%arg0: i32) -> (i32, i32) {
    %c0_i32 = arith.constant 0 : i32
    %c0_i32_0 = arith.constant 0 : i32
    %c0_i32_1 = arith.constant 0 : i32
    return %c0_i32, %c0_i32_0 : i32, i32
  }
  func.func @transform_7(%arg0: i32) -> (i32, i32) {
    %c0_i32 = arith.constant 0 : i32
    %c0_i32_0 = arith.constant 0 : i32
    return %arg0, %c0_i32 : i32, i32
  }
}

</mosaic_0001>

<llo_original>
// kernel: st_block_forward.1
$region0: #{st_block_forward.1}
  #allocation0 [shape = 'u32[]', space=smem, size = 0x4, offset = 0x4, fixed_abs, tag = 'smem constant byte address 0x4 - core index']
  #allocation1 [shape = 'u32[72,128]{1,0:T(1,128)}', space=vmem, size = 0x9000, scoped, tag = 'internal scratch']
  %s0 = inlined_call_operand.vmem [shape: f32[64,10], index: 0, kind: input, shape index: {}]
  %s1 = inlined_call_operand.vmem [shape: bf16[10,128], index: 1, kind: input, shape index: {}]
  %s2 = inlined_call_operand.vmem [shape: f32[1,128], index: 2, kind: input, shape index: {}]
  %s3 = inlined_call_operand.vmem [shape: bf16[128,128], index: 3, kind: input, shape index: {}]
  %s4 = inlined_call_operand.vmem [shape: f32[1,128], index: 4, kind: input, shape index: {}]
  %s5 = inlined_call_operand.vmem [shape: bf16[128,128], index: 5, kind: input, shape index: {}]
  %s6 = inlined_call_operand.vmem [shape: f32[1,128], index: 6, kind: input, shape index: {}]
  %s7 = inlined_call_operand.vmem [shape: f32[64,20], index: 7, kind: output, shape index: {}]
  %s8 = sld [smem:[#allocation0]]
  $region61: #{st_block_forward.1} parent=0
    _
  %s10 = ssub.s32 1, %s8
  %s11 = scalar_select 0, %s10, %s8
  loop: start=0, step=1, limit=4
  $region2: #{st_block_forward.1} parent=0 // loop_pre_header
    _
  $region3: #{st_block_forward.1} parent=0 // loop_header
    %s13 = sphi 0, %s17
    %p14 = scmp.ge.s32.totalorder %s13, 4
    %s23 = sphi 0, %s25
    %s26 = sphi 0, %s23
    %s27 = sphi 0, %s26
    %s43 = sphi 0, %s27
    %s47 = sphi 0, %s47
    %s49 = sphi 0, %s47
    %s50 = sphi 0, %s49
    %s64 = sphi 0, %s50
    %s68 = sphi 0, %s68
    %s70 = sphi 0, %s68
    %s71 = sphi 0, %s70
    %s85 = sphi 0, %s71
    %s89 = sphi 0, %s89
    %s91 = sphi 0, %s89
    %s92 = sphi 0, %s91
    %s106 = sphi 0, %s92
    %s110 = sphi 0, %s110
    %s112 = sphi 0, %s110
    %s113 = sphi 0, %s112
    %s127 = sphi 0, %s113
    %s131 = sphi 0, %s131
    %s133 = sphi 0, %s131
    %s134 = sphi 0, %s133
    %s148 = sphi 0, %s134
    %s152 = sphi 0, %s152
    %s154 = sphi 0, %s152
    %s155 = sphi 0, %s154
    %s169 = sphi 0, %s155
    %s175 = sphi 0, %s177
    %s178 = sphi 0, %s175
    %s179 = sphi 0, %s178
    %s195 = sphi 0, %s179
  $region4: #{st_block_forward.1} parent=0 // loop_header_branch
    %16 = sbr.rel (%p14) target = $region8
  $region5: #{st_block_forward.1} parent=0 // loop_body
    %s18 = ssub.s32 %s13, 1
    %s19 = ssub.s32 %s13, 2
    %s20 = sadd.s32 %s13, 1
    %s21 = ssub.s32 %s13, %s20
    %p22 = scmp.eq.s32.totalorder %s21, 0
    %s24 = sadd.s32 %s23, 1
    %s25 = scalar_select %p22, %s23, %s24
    %p28 = pneg %p22
    %p29 = scmp.eq.s32.totalorder %s13, 1
    %p30 = por %p28, %p29
    %p31 = scmp.ne.s32.totalorder %s23, %s26
    %p32 = scmp.eq.s32.totalorder %s13, 0
    %p33 = por %p31, %p32
    %p34 = scmp.ne.s32.totalorder %s23, %s26
    %p35 = scmp.eq.s32.totalorder %s18, 1
    %p36 = por %p34, %p35
    %p37 = scmp.ne.s32.totalorder %s26, %s27
    %p38 = scmp.eq.s32.totalorder %s18, 0
    %p39 = por %p37, %p38
    %p40 = scmp.ne.s32.totalorder %s26, %s27
    %p41 = scmp.eq.s32.totalorder %s19, 1
    %p42 = por %p40, %p41
    %p44 = scmp.ne.s32.totalorder %s27, %s43
    %p45 = scmp.eq.s32.totalorder %s19, 0
    %p46 = por %p44, %p45
    %s48 = sadd.s32 %s47, 1
    %p51 = scmp.eq.s32.totalorder %s13, 1
    %p52 = scmp.ne.s32.totalorder %s47, %s49
    %p53 = scmp.eq.s32.totalorder %s13, 0
    %p54 = por %p52, %p53
    %p55 = scmp.ne.s32.totalorder %s47, %s49
    %p56 = scmp.eq.s32.totalorder %s18, 1
    %p57 = por %p55, %p56
    %p58 = scmp.ne.s32.totalorder %s49, %s50
    %p59 = scmp.eq.s32.totalorder %s18, 0
    %p60 = por %p58, %p59
    %p61 = scmp.ne.s32.totalorder %s49, %s50
    %p62 = scmp.eq.s32.totalorder %s19, 1
    %p63 = por %p61, %p62
    %p65 = scmp.ne.s32.totalorder %s50, %s64
    %p66 = scmp.eq.s32.totalorder %s19, 0
    %p67 = por %p65, %p66
    %s69 = sadd.s32 %s68, 1
    %p72 = scmp.eq.s32.totalorder %s13, 1
    %p73 = scmp.ne.s32.totalorder %s68, %s70
    %p74 = scmp.eq.s32.totalorder %s13, 0
    %p75 = por %p73, %p74
    %p76 = scmp.ne.s32.totalorder %s68, %s70
    %p77 = scmp.eq.s32.totalorder %s18, 1
    %p78 = por %p76, %p77
    %p79 = scmp.ne.s32.totalorder %s70, %s71
    %p80 = scmp.eq.s32.totalorder %s18, 0
    %p81 = por %p79, %p80
    %p82 = scmp.ne.s32.totalorder %s70, %s71
    %p83 = scmp.eq.s32.totalorder %s19, 1
    %p84 = por %p82, %p83
    %p86 = scmp.ne.s32.totalorder %s71, %s85
    %p87 = scmp.eq.s32.totalorder %s19, 0
    %p88 = por %p86, %p87
    %s90 = sadd.s32 %s89, 1
    %p93 = scmp.eq.s32.totalorder %s13, 1
    %p94 = scmp.ne.s32.totalorder %s89, %s91
    %p95 = scmp.eq.s32.totalorder %s13, 0
    %p96 = por %p94, %p95
    %p97 = scmp.ne.s32.totalorder %s89, %s91
    %p98 = scmp.eq.s32.totalorder %s18, 1
    %p99 = por %p97, %p98
    %p100 = scmp.ne.s32.totalorder %s91, %s92
    %p101 = scmp.eq.s32.totalorder %s18, 0
    %p102 = por %p100, %p101
    %p103 = scmp.ne.s32.totalorder %s91, %s92
    %p104 = scmp.eq.s32.totalorder %s19, 1
    %p105 = por %p103, %p104
    %p107 = scmp.ne.s32.totalorder %s92, %s106
    %p108 = scmp.eq.s32.totalorder %s19, 0
    %p109 = por %p107, %p108
    %s111 = sadd.s32 %s110, 1
    %p114 = scmp.eq.s32.totalorder %s13, 1
    %p115 = scmp.ne.s32.totalorder %s110, %s112
    %p116 = scmp.eq.s32.totalorder %s13, 0
    %p117 = por %p115, %p116
    %p118 = scmp.ne.s32.totalorder %s110, %s112
    %p119 = scmp.eq.s32.totalorder %s18, 1
    %p120 = por %p118, %p119
    %p121 = scmp.ne.s32.totalorder %s112, %s113
    %p122 = scmp.eq.s32.totalorder %s18, 0
    %p123 = por %p121, %p122
    %p124 = scmp.ne.s32.totalorder %s112, %s113
    %p125 = scmp.eq.s32.totalorder %s19, 1
    %p126 = por %p124, %p125
    %p128 = scmp.ne.s32.totalorder %s113, %s127
    %p129 = scmp.eq.s32.totalorder %s19, 0
    %p130 = por %p128, %p129
    %s132 = sadd.s32 %s131, 1
    %p135 = scmp.eq.s32.totalorder %s13, 1
    %p136 = scmp.ne.s32.totalorder %s131, %s133
    %p137 = scmp.eq.s32.totalorder %s13, 0
    %p138 = por %p136, %p137
    %p139 = scmp.ne.s32.totalorder %s131, %s133
    %p140 = scmp.eq.s32.totalorder %s18, 1
    %p141 = por %p139, %p140
    %p142 = scmp.ne.s32.totalorder %s133, %s134
    %p143 = scmp.eq.s32.totalorder %s18, 0
    %p144 = por %p142, %p143
    %p145 = scmp.ne.s32.totalorder %s133, %s134
    %p146 = scmp.eq.s32.totalorder %s19, 1
    %p147 = por %p145, %p146
    %p149 = scmp.ne.s32.totalorder %s134, %s148
    %p150 = scmp.eq.s32.totalorder %s19, 0
    %p151 = por %p149, %p150
    %s153 = sadd.s32 %s152, 1
    %p156 = scmp.eq.s32.totalorder %s13, 1
    %p157 = scmp.ne.s32.totalorder %s152, %s154
    %p158 = scmp.eq.s32.totalorder %s13, 0
    %p159 = por %p157, %p158
    %p160 = scmp.ne.s32.totalorder %s152, %s154
    %p161 = scmp.eq.s32.totalorder %s18, 1
    %p162 = por %p160, %p161
    %p163 = scmp.ne.s32.totalorder %s154, %s155
    %p164 = scmp.eq.s32.totalorder %s18, 0
    %p165 = por %p163, %p164
    %p166 = scmp.ne.s32.totalorder %s154, %s155
    %p167 = scmp.eq.s32.totalorder %s19, 1
    %p168 = por %p166, %p167
    %p170 = scmp.ne.s32.totalorder %s155, %s169
    %p171 = scmp.eq.s32.totalorder %s19, 0
    %p172 = por %p170, %p171
    %s173 = ssub.s32 %s13, %s20
    %p174 = scmp.eq.s32.totalorder %s173, 0
    %s176 = sadd.s32 %s175, 1
    %s177 = scalar_select %p174, %s175, %s176
    %p180 = pneg %p174
    %p181 = scmp.eq.s32.totalorder %s13, 1
    %p182 = por %p180, %p181
    %p183 = scmp.ne.s32.totalorder %s175, %s178
    %p184 = scmp.eq.s32.totalorder %s13, 0
    %p185 = por %p183, %p184
    %p186 = scmp.ne.s32.totalorder %s175, %s178
    %p187 = scmp.eq.s32.totalorder %s18, 1
    %p188 = por %p186, %p187
    %p189 = scmp.ne.s32.totalorder %s178, %s179
    %p190 = scmp.eq.s32.totalorder %s18, 0
    %p191 = por %p189, %p190
    %p192 = scmp.ne.s32.totalorder %s178, %s179
    %p193 = scmp.eq.s32.totalorder %s19, 1
    %p194 = por %p192, %p193
    %p196 = scmp.ne.s32.totalorder %s179, %s195
    %p197 = scmp.eq.s32.totalorder %s19, 0
    %p198 = por %p196, %p197
    %p199 = scmp.le.s32.totalorder 1, %s13
    %p200 = scmp.lt.s32.totalorder %s13, 3
    %p201 = pnand %p199, %p200
    %p202 = pneg %p201
    // Predicated region
    $region9: #{st_block_forward.1} parent=5 // pred_check
      _
    $region10: #{st_block_forward.1} parent=5 // pred_check_branch
      %204 = sbr.rel (%p201) target = $region12
    $region11: #{st_block_forward.1} parent=5 // pred_region
      %s205 = ssub.s32 %s13, 1
      // Predicated region
      $region13: #{st_block_forward.1} parent=11 // pred_check
        %p206 = pneg %p60
      $region14: #{st_block_forward.1} parent=11 // pred_check_branch
        %208 = sbr.rel (%p206) target = $region16
      $region15: #{st_block_forward.1} parent=11 // pred_region
        _
      $region16: #{st_block_forward.1} parent=11 // pred_fallthru
        _
      // Predicated region
      $region17: #{st_block_forward.1} parent=11 // pred_check
        %p209 = pneg %p81
      $region18: #{st_block_forward.1} parent=11 // pred_check_branch
        %211 = sbr.rel (%p209) target = $region20
      $region19: #{st_block_forward.1} parent=11 // pred_region
        _
      $region20: #{st_block_forward.1} parent=11 // pred_fallthru
        _
      // Predicated region
      $region21: #{st_block_forward.1} parent=11 // pred_check
        %p212 = pneg %p102
      $region22: #{st_block_forward.1} parent=11 // pred_check_branch
        %214 = sbr.rel (%p212) target = $region24
      $region23: #{st_block_forward.1} parent=11 // pred_region
        _
      $region24: #{st_block_forward.1} parent=11 // pred_fallthru
        _
      // Predicated region
      $region25: #{st_block_forward.1} parent=11 // pred_check
        %p215 = pneg %p123
      $region26: #{st_block_forward.1} parent=11 // pred_check_branch
        %217 = sbr.rel (%p215) target = $region28
      $region27: #{st_block_forward.1} parent=11 // pred_region
        _
      $region28: #{st_block_forward.1} parent=11 // pred_fallthru
        _
      // Predicated region
      $region29: #{st_block_forward.1} parent=11 // pred_check
        %p218 = pneg %p144
      $region30: #{st_block_forward.1} parent=11 // pred_check_branch
        %220 = sbr.rel (%p218) target = $region32
      $region31: #{st_block_forward.1} parent=11 // pred_region
        _
      $region32: #{st_block_forward.1} parent=11 // pred_fallthru
        _
      // Predicated region
      $region33: #{st_block_forward.1} parent=11 // pred_check
        %p221 = pneg %p165
      $region34: #{st_block_forward.1} parent=11 // pred_check_branch
        %223 = sbr.rel (%p221) target = $region36
      $region35: #{st_block_forward.1} parent=11 // pred_region
        _
      $region36: #{st_block_forward.1} parent=11 // pred_fallthru
        _
    $region12: #{st_block_forward.1} parent=5 // pred_fallthru
      _
    %p224 = scmp.lt.s32.totalorder %s13, 2
    // Predicated region
    $region37: #{st_block_forward.1} parent=5 // pred_check
      %p225 = pneg %p224
    $region38: #{st_block_forward.1} parent=5 // pred_check_branch
      %227 = sbr.rel (%p225) target = $region40
    $region39: #{st_block_forward.1} parent=5 // pred_region
      // Predicated region
      $region41: #{st_block_forward.1} parent=39 // pred_check
        %p228 = pneg %p33
      $region42: #{st_block_forward.1} parent=39 // pred_check_branch
        %230 = sbr.rel (%p228) target = $region44
      $region43: #{st_block_forward.1} parent=39 // pred_region
        %s231 = smul.u32 4, %s13
        %p232 = scmp.lt.s32.totalorder %s231, 7
        %s233 = scalar_select %p232, %s231, 7
        %s234 = smul.addr %s233, 8
        %s235 = scalar_lea.vmem %s0, %s234
        %s236 = smul.u32 4, %s13
      $region44: #{st_block_forward.1} parent=39 // pred_fallthru
        _
    $region40: #{st_block_forward.1} parent=5 // pred_fallthru
      _
    %p237 = scmp.le.s32.totalorder 1, %s13
    %p238 = scmp.lt.s32.totalorder %s13, 3
    %p239 = pnand %p237, %p238
    %p240 = pneg %p239
    // Predicated region
    $region45: #{st_block_forward.1} parent=5 // pred_check
      _
    $region46: #{st_block_forward.1} parent=5 // pred_check_branch
      %242 = sbr.rel (%p239) target = $region48
    $region47: #{st_block_forward.1} parent=5 // pred_region
      %s243 = ssub.s32 %s13, 1
      %s244 = smul.u32 4, %s18
      %p245 = scmp.lt.s32.totalorder %s244, 7
      %s246 = scalar_select %p245, %s244, 7
      %s247 = smul.addr %s246, 8
      %s248 = scalar_lea.vmem %s0, %s247
      %p249 = pneg %p39
      %p250 = pneg %p36
      %p251 = pneg %p60
      %p252 = pneg %p57
      %p253 = pneg %p81
      %p254 = pneg %p78
      %p255 = pneg %p102
      %p256 = pneg %p99
      %p257 = pneg %p123
      %p258 = pneg %p120
      %p259 = pneg %p144
      %p260 = pneg %p141
      %p261 = pneg %p165
      %p262 = pneg %p162
      %p263 = pneg %p191
      %p264 = pneg %p188
      %s265 = smul.u32 4, %s18
      %p266 = scmp.lt.s32.totalorder %s265, 7
      %s267 = scalar_select %p266, %s265, 7
      %s268 = smul.addr %s267, 8
      %s269 = scalar_lea.vmem %s7, %s268
      %s270 = smul.u32 4, %s18
      %p271 = scmp.lt.s32.totalorder %s270, 7
      %s272 = scalar_select %p271, %s270, 7
      %s273 = smul.addr %s272, 8
      %s274 = scalar_lea.vmem %s0, %s273
      %s275 = smul.u32 4, %s18
      %s276 = smul.u32 4, %s18
      %p277 = scmp.lt.s32.totalorder %s276, 7
      %s278 = scalar_select %p277, %s276, 7
      %s279 = smul.addr %s278, 8
      %s280 = scalar_lea.vmem %s7, %s279
      %s281 = smul.u32 4, %s18
      %v283 = vld [vmem:[%s274] sm:$0xff]
      %v284 = vld [vmem:[%s274 + $0x8] sm:$0xff]
      %v285 = vld [vmem:[%s274 + $0x10] sm:$0xff]
      %v286 = vld [vmem:[%s274 + $0x18] sm:$0xff]
      %v287 = vpack.c.bf16 %v284, %v283
      %v288 = vpack.c.bf16 %v286, %v285
      %v289 = vld [vmem:[%s1] sm:$0xf]
      %v290 = vld [vmem:[%s1 + $0x4] sm:$0x1]
      %v291 = vld [vmem:[%s2] sm:$0x1]
      %v293 = vperm.slane %v291, 0
      %v297 = vunpack.c.l.b16 %v289
      %v298 = vunpack.c.l.b16 %v290
      %v299 = vpack.c.b16 %v298, %v297
      %vm300 = vcmask 80896
      %v302 = vsel %vm300, %v287, 0
      %v305 = vsel %vm300, %v288, 0
      %vm307 = vcmask 1044480
      %v309 = vsel %vm307, %v299, 0
      %311 = vmatpush.bf16.msra.mxu0 0
      %312 = vmatpush.bf16.msra.mxu0 0
      %313 = vmatpush.bf16.msra.mxu0 0
      %314 = vmatpush.bf16.msra.mxu0 0
      %315 = vmatpush.bf16.msra.mxu0 0
      %316 = vmatpush.bf16.msra.mxu0 0
      %317 = vmatpush.bf16.msra.mxu0 0
      %318 = vmatpush.bf16.msra.mxu0 %v309
      %319 = vmatmul.bf16.gmra.mxu0 %v302
      %v320 = vpop.f32.mrf.mxu0
      %v321 = vadd.f32 %v293, %v320
      %v322 = vpop.f32.mrf.mxu0
      %v323 = vadd.f32 %v293, %v322
      %324 = vmatmul.bf16.gmra.mxu0 %v305
      %v325 = vpop.f32.mrf.mxu0
      %v326 = vadd.f32 %v293, %v325
      %v327 = vpop.f32.mrf.mxu0
      %v328 = vadd.f32 %v293, %v327
      %329 = vdwg.mxu0
      %vm330 = vcmp.gt.f32.partialorder %v321, 0.0
      %vm331 = vcmp.gt.f32.partialorder %v323, 0.0
      %vm332 = vcmp.gt.f32.partialorder %v326, 0.0
      %vm333 = vcmp.gt.f32.partialorder %v328, 0.0
      %v334 = vmul.f32 %v321, 0.2
      %v335 = vmul.f32 %v323, 0.2
      %v336 = vmul.f32 %v326, 0.2
      %v337 = vmul.f32 %v328, 0.2
      %v338 = vsel %vm330, %v321, %v334
      %v339 = vsel %vm331, %v323, %v335
      %v340 = vsel %vm332, %v326, %v336
      %v341 = vsel %vm333, %v328, %v337
      %v342 = vpack.c.bf16 %v339, %v338
      %v343 = vpack.c.bf16 %v341, %v340
      %v344 = vld [vmem:[%s3] sm:$0xf]
      %v345 = vld [vmem:[%s3 + $0x4] sm:$0xf]
      %v346 = vld [vmem:[%s3 + $0x8] sm:$0xf]
      %v347 = vld [vmem:[%s3 + $0xc] sm:$0xf]
      %v348 = vld [vmem:[%s3 + $0x10] sm:$0xf]
      %v349 = vld [vmem:[%s3 + $0x14] sm:$0xf]
      %v350 = vld [vmem:[%s3 + $0x18] sm:$0xf]
      %v351 = vld [vmem:[%s3 + $0x1c] sm:$0xf]
      %v352 = vld [vmem:[%s3 + $0x20] sm:$0xf]
      %v353 = vld [vmem:[%s3 + $0x24] sm:$0xf]
      %v354 = vld [vmem:[%s3 + $0x28] sm:$0xf]
      %v355 = vld [vmem:[%s3 + $0x2c] sm:$0xf]
      %v356 = vld [vmem:[%s3 + $0x30] sm:$0xf]
      %v357 = vld [vmem:[%s3 + $0x34] sm:$0xf]
      %v358 = vld [vmem:[%s3 + $0x38] sm:$0xf]
      %v359 = vld [vmem:[%s3 + $0x3c] sm:$0xf]
      %v360 = vld [vmem:[%s4] sm:$0x1]
      %v362 = vperm.slane %v360, 0
      %v380 = vunpack.c.l.b16 %v344
      %v381 = vunpack.c.l.b16 %v345
      %v382 = vunpack.c.l.b16 %v346
      %v383 = vunpack.c.l.b16 %v347
      %v384 = vunpack.c.l.b16 %v348
      %v385 = vunpack.c.l.b16 %v349
      %v386 = vunpack.c.l.b16 %v350
      %v387 = vunpack.c.l.b16 %v351
      %v388 = vunpack.c.l.b16 %v352
      %v389 = vunpack.c.l.b16 %v353
      %v390 = vunpack.c.l.b16 %v354
      %v391 = vunpack.c.l.b16 %v355
      %v392 = vunpack.c.l.b16 %v356
      %v393 = vunpack.c.l.b16 %v357
      %v394 = vunpack.c.l.b16 %v358
      %v395 = vunpack.c.l.b16 %v359
      %v396 = vpack.c.b16 %v381, %v380
      %v397 = vpack.c.b16 %v383, %v382
      %v398 = vpack.c.b16 %v385, %v384
      %v399 = vpack.c.b16 %v387, %v386
      %v400 = vpack.c.b16 %v389, %v388
      %v401 = vpack.c.b16 %v391, %v390
      %v402 = vpack.c.b16 %v393, %v392
      %v403 = vpack.c.b16 %v395, %v394
      %412 = vmatpush.bf16.msra.mxu0 %v403
      %413 = vmatpush.bf16.msra.mxu0 %v402
      %414 = vmatpush.bf16.msra.mxu0 %v401
      %415 = vmatpush.bf16.msra.mxu0 %v400
      %416 = vmatpush.bf16.msra.mxu0 %v399
      %417 = vmatpush.bf16.msra.mxu0 %v398
      %418 = vmatpush.bf16.msra.mxu0 %v397
      %419 = vmatpush.bf16.msra.mxu0 %v396
      %420 = vmatmul.bf16.gmra.mxu0 %v342
      %v421 = vpop.f32.mrf.mxu0
      %v422 = vadd.f32 %v362, %v421
      %v423 = vpop.f32.mrf.mxu0
      %v424 = vadd.f32 %v362, %v423
      %425 = vmatmul.bf16.gmra.mxu0 %v343
      %v426 = vpop.f32.mrf.mxu0
      %v427 = vadd.f32 %v362, %v426
      %v428 = vpop.f32.mrf.mxu0
      %v429 = vadd.f32 %v362, %v428
      %430 = vdwg.mxu0
      %vm431 = vcmp.gt.f32.partialorder %v422, 0.0
      %vm432 = vcmp.gt.f32.partialorder %v424, 0.0
      %vm433 = vcmp.gt.f32.partialorder %v427, 0.0
      %vm434 = vcmp.gt.f32.partialorder %v429, 0.0
      %v435 = vmul.f32 %v422, 0.2
      %v436 = vmul.f32 %v424, 0.2
      %v437 = vmul.f32 %v427, 0.2
      %v438 = vmul.f32 %v429, 0.2
      %v439 = vsel %vm431, %v422, %v435
      %v440 = vsel %vm432, %v424, %v436
      %v441 = vsel %vm433, %v427, %v437
      %v442 = vsel %vm434, %v429, %v438
      %v443 = vpack.c.bf16 %v440, %v439
      %v444 = vpack.c.bf16 %v442, %v441
      %v445 = vld [vmem:[%s5] sm:$0xf]
      %v446 = vld [vmem:[%s5 + $0x4] sm:$0xf]
      %v447 = vld [vmem:[%s5 + $0x8] sm:$0xf]
      %v448 = vld [vmem:[%s5 + $0xc] sm:$0xf]
      %v449 = vld [vmem:[%s5 + $0x10] sm:$0xf]
      %v450 = vld [vmem:[%s5 + $0x14] sm:$0xf]
      %v451 = vld [vmem:[%s5 + $0x18] sm:$0xf]
      %v452 = vld [vmem:[%s5 + $0x1c] sm:$0xf]
      %v453 = vld [vmem:[%s5 + $0x20] sm:$0xf]
      %v454 = vld [vmem:[%s5 + $0x24] sm:$0xf]
      %v455 = vld [vmem:[%s5 + $0x28] sm:$0xf]
      %v456 = vld [vmem:[%s5 + $0x2c] sm:$0xf]
      %v457 = vld [vmem:[%s5 + $0x30] sm:$0xf]
      %v458 = vld [vmem:[%s5 + $0x34] sm:$0xf]
      %v459 = vld [vmem:[%s5 + $0x38] sm:$0xf]
      %v460 = vld [vmem:[%s5 + $0x3c] sm:$0xf]
      %v461 = vld [vmem:[%s6] sm:$0x1]
      %v463 = vperm.slane %v461, 0
      %v481 = vunpack.c.l.b16 %v445
      %v482 = vunpack.c.l.b16 %v446
      %v483 = vunpack.c.l.b16 %v447
      %v484 = vunpack.c.l.b16 %v448
      %v485 = vunpack.c.l.b16 %v449
      %v486 = vunpack.c.l.b16 %v450
      %v487 = vunpack.c.l.b16 %v451
      %v488 = vunpack.c.l.b16 %v452
      %v489 = vunpack.c.l.b16 %v453
      %v490 = vunpack.c.l.b16 %v454
      %v491 = vunpack.c.l.b16 %v455
      %v492 = vunpack.c.l.b16 %v456
      %v493 = vunpack.c.l.b16 %v457
      %v494 = vunpack.c.l.b16 %v458
      %v495 = vunpack.c.l.b16 %v459
      %v496 = vunpack.c.l.b16 %v460
      %v497 = vpack.c.b16 %v482, %v481
      %v498 = vpack.c.b16 %v484, %v483
      %v499 = vpack.c.b16 %v486, %v485
      %v500 = vpack.c.b16 %v488, %v487
      %v501 = vpack.c.b16 %v490, %v489
      %v502 = vpack.c.b16 %v492, %v491
      %v503 = vpack.c.b16 %v494, %v493
      %v504 = vpack.c.b16 %v496, %v495
      %513 = vmatpush.bf16.msra.mxu0 %v504
      %514 = vmatpush.bf16.msra.mxu0 %v503
      %515 = vmatpush.bf16.msra.mxu0 %v502
      %516 = vmatpush.bf16.msra.mxu0 %v501
      %517 = vmatpush.bf16.msra.mxu0 %v500
      %518 = vmatpush.bf16.msra.mxu0 %v499
      %519 = vmatpush.bf16.msra.mxu0 %v498
      %520 = vmatpush.bf16.msra.mxu0 %v497
      %521 = vmatmul.bf16.gmra.mxu0 %v443
      %v522 = vpop.f32.mrf.mxu0
      %v523 = vadd.f32 %v463, %v522
      %v524 = vpop.f32.mrf.mxu0
      %v525 = vadd.f32 %v463, %v524
      %526 = vmatmul.bf16.gmra.mxu0 %v444
      %v527 = vpop.f32.mrf.mxu0
      %v528 = vadd.f32 %v463, %v527
      %v529 = vpop.f32.mrf.mxu0
      %v530 = vadd.f32 %v463, %v529
      %531 = vdwg.mxu0
      %vm532 = vcmask 162816
      %533 = vst.msk [vmem:[%s280] sm:$0xff] %vm532, %v523
      %534 = vst.msk [vmem:[%s280 + $0x8] sm:$0xff] %vm532, %v525
      %535 = vst.msk [vmem:[%s280 + $0x10] sm:$0xff] %vm532, %v528
      %536 = vst.msk [vmem:[%s280 + $0x18] sm:$0xff] %vm532, %v530
      %s537 = smul.u32 4, %s18
      %p538 = scmp.lt.s32.totalorder %s537, 7
      %s539 = scalar_select %p538, %s537, 7
      %s540 = smul.addr %s539, 8
      %s541 = scalar_lea.vmem %s7, %s540
      // Predicated region
      $region49: #{st_block_forward.1} parent=47 // pred_check
        %p542 = pneg %p188
      $region50: #{st_block_forward.1} parent=47 // pred_check_branch
        %544 = sbr.rel (%p542) target = $region52
      $region51: #{st_block_forward.1} parent=47 // pred_region
        %s545 = smul.u32 4, %s18
      $region52: #{st_block_forward.1} parent=47 // pred_fallthru
        _
    $region48: #{st_block_forward.1} parent=5 // pred_fallthru
      _
    %p546 = scmp.le.s32.totalorder 2, %s13
    // Predicated region
    $region53: #{st_block_forward.1} parent=5 // pred_check
      %p547 = pneg %p546
    $region54: #{st_block_forward.1} parent=5 // pred_check_branch
      %549 = sbr.rel (%p547) target = $region56
    $region55: #{st_block_forward.1} parent=5 // pred_region
      %s550 = ssub.s32 %s13, 2
      // Predicated region
      $region57: #{st_block_forward.1} parent=55 // pred_check
        %p551 = pneg %p194
      $region58: #{st_block_forward.1} parent=55 // pred_check_branch
        %553 = sbr.rel (%p551) target = $region60
      $region59: #{st_block_forward.1} parent=55 // pred_region
        %s554 = smul.u32 4, %s19
        %p555 = scmp.lt.s32.totalorder %s554, 7
        %s556 = scalar_select %p555, %s554, 7
        %s557 = smul.addr %s556, 8
        %s558 = scalar_lea.vmem %s7, %s557
      $region60: #{st_block_forward.1} parent=55 // pred_fallthru
        _
    $region56: #{st_block_forward.1} parent=5 // pred_fallthru
      _
  $region6: #{st_block_forward.1} parent=0 // loop_footer
    %s17 = sadd.s32 1, %s13
  $region7: #{st_block_forward.1} parent=0 // loop_footer_branch
    %12 = sbr.rel target = $region3
  $region8: #{st_block_forward.1} parent=0 // loop_exit
    _

</llo_original>
